<compile_context>
chip_gen: v6e
topology: v6e:2x2x1
jax: 0.10.0
libtpu: 0.0.40
codegen_flags: <defaults>
</compile_context>

<pallas_src>
import functools
import math

import jax
import jax.numpy as jnp
from jax.experimental import pallas as pl
from jax.experimental.pallas import tpu as pltpu


def _gem_kernel(p_ref, x_ref, o_ref, *, eps, cols, inv_cols, log_cols):
    # p_ref: (1,) f32 scalar parameter in SMEM
    # x_ref: (tile_r, cols) block in VMEM (native dtype, upcast to f32 here)
    # o_ref: (1, tile_r) lane-dense output block in VMEM
    p = p_ref[0]
    xc = jnp.maximum(x_ref[...].astype(jnp.float32), eps)  # clamp(min=eps) > 0
    ones_col = jnp.ones((cols, 1), jnp.float32)             # MXU row-sum vector

    @pl.when(p == 1.0)
    def _():
        # Fast path: generalized mean with p=1 is a plain average pool.
        # Row sum on the MXU, epilogue + store lane-dense.
        s = jnp.dot(xc, ones_col, preferred_element_type=jnp.float32)  # (tile_r,1)
        o_ref[...] = (jnp.transpose(s) * inv_cols).astype(o_ref.dtype)

    @pl.when(p != 1.0)
    def _():
        # x^p = exp(p * log(x)); positivity guaranteed by the clamp (EUP work).
        xp = jnp.exp(p * jnp.log(xc))
        # Spatial reduction on the MXU (frees XLU/VALU), result (tile_r, 1).
        s = jnp.dot(xp, ones_col, preferred_element_type=jnp.float32)
        st = jnp.transpose(s)  # (1, tile_r): lane-dense epilogue + store
        inv_p = 1.0 / p
        # mean(xp)^(1/p) = exp((log(sum) - log(cols)) / p); log(cols) static.
        o_ref[...] = jnp.exp((jnp.log(st) - log_cols) * inv_p).astype(o_ref.dtype)


def _round_down(v, m):
    return (v // m) * m


def gem_pallas(x, p, eps=1e-6):
    """x: (N, C, H, W), p: (1,) float parameter. Returns (N, C, 1, 1)."""
    N, C, H, W = x.shape
    rows = N * C
    cols = H * W
    x2d = x.reshape(rows, cols)

    # Size tiles from the lane-padded (VMEM) row width in the *native* dtype.
    itemsize = x2d.dtype.itemsize
    cols_lanes = pl.cdiv(cols, 128) * 128
    bytes_per_row = cols_lanes * itemsize

    # ~4 MiB per input buffer (double-buffered by the pipeline), cap 8192 rows.
    tile_r = (4 * 1024 * 1024) // max(1, bytes_per_row)
    tile_r = max(128, min(tile_r, 8192))

    # Ensure >= 2 grid steps when the rows allow it, so a v7x megacore can
    # shard the "parallel" axis across both TensorCores.
    rows_128 = pl.cdiv(rows, 128) * 128
    half = _round_down(rows_128 // 2, 128)
    if half >= 128:
        tile_r = min(tile_r, half)
    tile_r = min(tile_r, rows_128)
    tile_r = max(128, _round_down(tile_r, 128))  # multiple of 128 (lane-dense out)

    # Pad rows so the last tile is not ragged (pad value 1.0 keeps the padded
    # rows' math finite; their outputs are sliced away below).
    rows_padded = pl.cdiv(rows, tile_r) * tile_r
    if rows_padded != rows:
        x2d = jnp.pad(x2d, ((0, rows_padded - rows), (0, 0)),
                      constant_values=1.0)

    grid = (rows_padded // tile_r,)
    p_arr = jnp.asarray(p, dtype=jnp.float32).reshape((1,))

    cost = pl.CostEstimate(
        flops=3 * rows_padded * cols,
        transcendentals=2 * rows_padded * cols + 2 * rows_padded,
        bytes_accessed=rows_padded * cols * itemsize + rows_padded * itemsize,
    )

    out_row = pl.pallas_call(
        functools.partial(
            _gem_kernel,
            eps=float(eps),
            cols=cols,
            inv_cols=1.0 / float(cols),
            log_cols=float(math.log(cols)),
        ),
        out_shape=jax.ShapeDtypeStruct((1, rows_padded), x.dtype),
        grid=grid,
        in_specs=[
            pl.BlockSpec(memory_space=pltpu.MemorySpace.SMEM),   # p (scalar)
            pl.BlockSpec((tile_r, cols), lambda i: (i, 0)),      # x row tile
        ],
        out_specs=pl.BlockSpec((1, tile_r), lambda i: (0, i)),   # lane-dense out
        compiler_params=pltpu.CompilerParams(
            dimension_semantics=("parallel",),
            vmem_limit_bytes=32 * 1024 * 1024,
        ),
        cost_estimate=cost,
    )(p_arr, x2d)

    return out_row[0, :rows].reshape(N, C, 1, 1)


def gem_reference(x, p, eps=1e-6):
    xp = jnp.power(jnp.maximum(x, eps), p[0])
    return jnp.power(jnp.mean(xp, axis=(-2, -1), keepdims=True), 1.0 / p[0])


if __name__ == "__main__":
    key = jax.random.PRNGKey(0)
    N, C, H, W = 2, 4, 16, 16
    x = jax.random.normal(key, (N, C, H, W), dtype=jnp.float32)
    eps = 1e-6

    # Parameter init mirrors GeM.__init__(p=1): p = ones(1) * 1  (fast path).
    p1 = jnp.ones((1,), dtype=jnp.float32)
    out1 = jax.block_until_ready(gem_pallas(x, p1, eps))
    ref1 = gem_reference(x, p1, eps)
    assert out1.shape == (N, C, 1, 1), out1.shape
    assert jnp.allclose(out1, ref1, atol=1e-4, rtol=1e-4), (
        f"p=1 max abs err {jnp.max(jnp.abs(out1 - ref1))}")

    # Also exercise the general p != 1 path.
    p3 = jnp.full((1,), 3.0, dtype=jnp.float32)
    out3 = jax.block_until_ready(gem_pallas(x, p3, eps))
    ref3 = gem_reference(x, p3, eps)
    assert jnp.allclose(out3, ref3, atol=1e-4, rtol=1e-4), (
        f"p=3 max abs err {jnp.max(jnp.abs(out3 - ref3))}")

    print("KERNEL_OK")
</pallas_src>

<mosaic_0001>
module attributes {stable_mosaic.version = 11 : i64} {
  func.func @_gem_kernel(%arg0: i32, %arg1: memref<1xf32, #tpu.memory_space<smem>>, %arg2: memref<128x256xf32, #tpu.memory_space<vmem>>, %arg3: memref<1x128xf32, #tpu.memory_space<vmem>>) attributes {dimension_semantics = [#tpu.dimension_semantics<parallel>], iteration_bounds = array<i64: 1>, scalar_prefetch = 0 : i64, scratch_operands = 0 : i64, tpu.core_type = #tpu.core_type<tc>, window_params = [{transform_indices = @transform_0, window_bounds = array<i64: 1>}, {transform_indices = @transform_1, window_bounds = array<i64: 128, 256>}, {transform_indices = @transform_2, window_bounds = array<i64: 1, 128>}]} {
    %c0 = arith.constant 0 : index
    %0 = memref.load %arg1[%c0] : memref<1xf32, #tpu.memory_space<smem>>
    %c0_0 = arith.constant 0 : index
    %c0_1 = arith.constant 0 : index
    %1 = vector.load %arg2[%c0_0, %c0_1] : memref<128x256xf32, #tpu.memory_space<vmem>>, vector<128x256xf32>
    %cst = arith.constant 9.99999997E-7 : f32
    %2 = vector.broadcast %cst : f32 to vector<128x256xf32>
    %3 = arith.maximumf %1, %2 : vector<128x256xf32>
    %cst_2 = arith.constant 1.000000e+00 : f32
    %4 = vector.broadcast %cst_2 : f32 to vector<256x1xf32>
    %cst_3 = arith.constant 1.000000e+00 : f32
    %5 = arith.cmpf oeq, %0, %cst_3 : f32
    %6 = arith.extui %5 : i1 to i32
    %c0_i32 = arith.constant 0 : i32
    %7 = arith.cmpi ne, %6, %c0_i32 : i32
    scf.if %7 {
      %cst_6 = arith.constant dense<0.000000e+00> : vector<128x1xf32>
      %11 = tpu.matmul %3, %4, %cst_6 {dimension_numbers = #tpu.dot_dimension_numbers<[1], [0], [0], [1], [0, 0, 1, 1], [], []>} : vector<128x256xf32>, vector<256x1xf32>, vector<128x1xf32> -> vector<128x1xf32>
      %12 = tpu.transpose %11, [1, 0] : vector<128x1xf32> -> vector<1x128xf32>
      %cst_7 = arith.constant 3.906250e-03 : f32
      %13 = vector.broadcast %cst_7 : f32 to vector<1x128xf32>
      %14 = arith.mulf %12, %13 : vector<1x128xf32>
      %c0_8 = arith.constant 0 : index
      %c0_9 = arith.constant 0 : index
      %15 = vector.load %arg3[%c0_8, %c0_9] : memref<1x128xf32, #tpu.memory_space<vmem>>, vector<1x128xf32>
      tpu.vector_store %arg3[%c0_8, %c0_9], %14 {strides = array<i32>} : memref<1x128xf32, #tpu.memory_space<vmem>>, vector<1x128xf32>,
    } else {
    }
    %cst_4 = arith.constant 1.000000e+00 : f32
    %8 = arith.cmpf one, %0, %cst_4 : f32
    %9 = arith.extui %8 : i1 to i32
    %c0_i32_5 = arith.constant 0 : i32
    %10 = arith.cmpi ne, %9, %c0_i32_5 : i32
    scf.if %10 {
      %11 = math.log %3 : vector<128x256xf32>
      %12 = vector.broadcast %0 : f32 to vector<128x256xf32>
      %13 = arith.mulf %12, %11 : vector<128x256xf32>
      %14 = math.exp %13 : vector<128x256xf32>
      %cst_6 = arith.constant dense<0.000000e+00> : vector<128x1xf32>
      %15 = tpu.matmul %14, %4, %cst_6 {dimension_numbers = #tpu.dot_dimension_numbers<[1], [0], [0], [1], [0, 0, 1, 1], [], []>} : vector<128x256xf32>, vector<256x1xf32>, vector<128x1xf32> -> vector<128x1xf32>
      %16 = tpu.transpose %15, [1, 0] : vector<128x1xf32> -> vector<1x128xf32>
      %cst_7 = arith.constant 1.000000e+00 : f32
      %17 = arith.divf %cst_7, %0 : f32
      %18 = math.log %16 : vector<1x128xf32>
      %cst_8 = arith.constant 5.54517746 : f32
      %19 = vector.broadcast %cst_8 : f32 to vector<1x128xf32>
      %20 = arith.subf %18, %19 : vector<1x128xf32>
      %21 = vector.broadcast %17 : f32 to vector<1x128xf32>
      %22 = arith.mulf %20, %21 : vector<1x128xf32>
      %23 = math.exp %22 : vector<1x128xf32>
      %c0_9 = arith.constant 0 : index
      %c0_10 = arith.constant 0 : index
      %24 = vector.load %arg3[%c0_9, %c0_10] : memref<1x128xf32, #tpu.memory_space<vmem>>, vector<1x128xf32>
      tpu.vector_store %arg3[%c0_9, %c0_10], %23 {strides = array<i32>} : memref<1x128xf32, #tpu.memory_space<vmem>>, vector<1x128xf32>,
    } else {
    }
    return
  }
  func.func @transform_0(%arg0: i32) -> i32 {
    %c0_i32 = arith.constant 0 : i32
    %c0_i32_0 = arith.constant 0 : i32
    return %c0_i32 : i32
  }
  func.func @transform_1(%arg0: i32) -> (i32, i32) {
    %c0_i32 = arith.constant 0 : i32
    %c0_i32_0 = arith.constant 0 : i32
    return %arg0, %c0_i32 : i32, i32
  }
  func.func @transform_2(%arg0: i32) -> (i32, i32) {
    %c0_i32 = arith.constant 0 : i32
    %c0_i32_0 = arith.constant 0 : i32
    return %c0_i32, %arg0 : i32, i32
  }
}

</mosaic_0001>

<llo_original>
// kernel: tpu_custom_call.1
$region0: #{tpu_custom_call.1}
  #allocation0 [shape = 'u32[]', space=smem, size = 0x4, offset = 0x4, fixed_abs, tag = 'smem constant byte address 0x4 - core index']
  #allocation1 [shape = 'u32[144,128]{1,0:T(1,128)}', space=vmem, size = 0x12000, scoped, tag = 'internal scratch']
  #allocation2 [shape = 'f32[1]{0:T(128)S(6)}', space=smem, size = 0x200, scoped, tag = 'scoped memory for tpu_custom_call.1']
  %s0 = inlined_call_operand.<no memory space> [shape: f32[1], index: 0, kind: input, shape index: {}]
  %s1 = inlined_call_operand.hbm [shape: f32[128,256], index: 1, kind: input, shape index: {}]
  %s2 = inlined_call_operand.hbm [shape: f32[1,128], index: 2, kind: output, shape index: {}]
  %s3 = sld [smem:[#allocation0]]
  $region30: #{tpu_custom_call.1} parent=0
    _
  %s5 = ssub.s32 1, %s3
  %s6 = scalar_select 0, %s5, %s3
  %7 = sst [smem:[#allocation2]] %s0
  $region1: #{tpu_custom_call.1} parent=0
    #allocation3 [shape = 'u8[131072]{0}', space=vmem, size = 0x20000, scoped, tag = 'input window, operand 1, single buffered']
    #allocation4 [shape = 's32[1]{0}', space=sflag, size = 0x4, scoped, tag = 'scoped memory for tpu_custom_call.1']
    #allocation5 [shape = 's32[1]{0}', space=sflag, size = 0x4, scoped, tag = 'scoped memory for tpu_custom_call.1']
    #allocation6 [shape = 'u8[512]{0}', space=vmem, size = 0x400, scoped, tag = 'output window, operand 0, single buffered']
    %8 = vsyncpa [#allocation4], 0
    %9 = vsyncpa [#allocation5], 0
    // Predicated region
    $region2: #{tpu_custom_call.1} parent=1 // pred_check
      _
    $region3: #{tpu_custom_call.1} parent=1 // pred_check_branch
      %11 = sbr.rel (0) target = $region5
    $region4: #{tpu_custom_call.1} parent=1 // pred_region
      _
    $region5: #{tpu_custom_call.1} parent=1 // pred_fallthru
      _
    // Predicated region
    $region6: #{tpu_custom_call.1} parent=1 // pred_check
      _
    $region7: #{tpu_custom_call.1} parent=1 // pred_check_branch
      %13 = sbr.rel (0) target = $region9
    $region8: #{tpu_custom_call.1} parent=1 // pred_region
      %s15 = ssub.s32 4096, 4096
      %16 = vsyncadd [#allocation4], %s15
      %s17 = sshll.u32 [#allocation3], 4
      %s18 = int_to_ptr.vmem [resolvable:$true] %s17
      %23 = dma.hbm_to_vmem [thread:$0]  %s1, 4096, %s18, [#allocation4], 256, 256, 16
    $region9: #{tpu_custom_call.1} parent=1 // pred_fallthru
      _
    // Predicated region
    $region10: #{tpu_custom_call.1} parent=1 // pred_check
      _
    $region11: #{tpu_custom_call.1} parent=1 // pred_check_branch
      %25 = sbr.rel (0) target = $region13
    $region12: #{tpu_custom_call.1} parent=1 // pred_region
      %26 = dma.done [#allocation4], 4096
    $region13: #{tpu_custom_call.1} parent=1 // pred_fallthru
      _
    %s27 = sld [smem:[#allocation2]]
    %v28 = vld [vmem:[#allocation3] sm:$0xff]
    %v29 = vld [vmem:[#allocation3 + $0x8] sm:$0xff]
    %v30 = vld [vmem:[#allocation3 + $0x10] sm:$0xff]
    %v31 = vld [vmem:[#allocation3 + $0x18] sm:$0xff]
    %v32 = vld [vmem:[#allocation3 + $0x20] sm:$0xff]
    %v33 = vld [vmem:[#allocation3 + $0x28] sm:$0xff]
    %v34 = vld [vmem:[#allocation3 + $0x30] sm:$0xff]
    %v35 = vld [vmem:[#allocation3 + $0x38] sm:$0xff]
    %v36 = vld [vmem:[#allocation3 + $0x40] sm:$0xff]
    %v37 = vld [vmem:[#allocation3 + $0x48] sm:$0xff]
    %v38 = vld [vmem:[#allocation3 + $0x50] sm:$0xff]
    %v39 = vld [vmem:[#allocation3 + $0x58] sm:$0xff]
    %v40 = vld [vmem:[#allocation3 + $0x60] sm:$0xff]
    %v41 = vld [vmem:[#allocation3 + $0x68] sm:$0xff]
    %v42 = vld [vmem:[#allocation3 + $0x70] sm:$0xff]
    %v43 = vld [vmem:[#allocation3 + $0x78] sm:$0xff]
    %v44 = vld [vmem:[#allocation3 + $0x80] sm:$0xff]
    %v45 = vld [vmem:[#allocation3 + $0x88] sm:$0xff]
    %v46 = vld [vmem:[#allocation3 + $0x90] sm:$0xff]
    %v47 = vld [vmem:[#allocation3 + $0x98] sm:$0xff]
    %v48 = vld [vmem:[#allocation3 + $0xa0] sm:$0xff]
    %v49 = vld [vmem:[#allocation3 + $0xa8] sm:$0xff]
    %v50 = vld [vmem:[#allocation3 + $0xb0] sm:$0xff]
    %v51 = vld [vmem:[#allocation3 + $0xb8] sm:$0xff]
    %v52 = vld [vmem:[#allocation3 + $0xc0] sm:$0xff]
    %v53 = vld [vmem:[#allocation3 + $0xc8] sm:$0xff]
    %v54 = vld [vmem:[#allocation3 + $0xd0] sm:$0xff]
    %v55 = vld [vmem:[#allocation3 + $0xd8] sm:$0xff]
    %v56 = vld [vmem:[#allocation3 + $0xe0] sm:$0xff]
    %v57 = vld [vmem:[#allocation3 + $0xe8] sm:$0xff]
    %v58 = vld [vmem:[#allocation3 + $0xf0] sm:$0xff]
    %v59 = vld [vmem:[#allocation3 + $0xf8] sm:$0xff]
    %v60 = vmax.f32 %v28, 1e-06
    %v61 = vmax.f32 %v29, 1e-06
    %v62 = vmax.f32 %v30, 1e-06
    %v63 = vmax.f32 %v31, 1e-06
    %v64 = vmax.f32 %v32, 1e-06
    %v65 = vmax.f32 %v33, 1e-06
    %v66 = vmax.f32 %v34, 1e-06
    %v67 = vmax.f32 %v35, 1e-06
    %v68 = vmax.f32 %v36, 1e-06
    %v69 = vmax.f32 %v37, 1e-06
    %v70 = vmax.f32 %v38, 1e-06
    %v71 = vmax.f32 %v39, 1e-06
    %v72 = vmax.f32 %v40, 1e-06
    %v73 = vmax.f32 %v41, 1e-06
    %v74 = vmax.f32 %v42, 1e-06
    %v75 = vmax.f32 %v43, 1e-06
    %v76 = vmax.f32 %v44, 1e-06
    %v77 = vmax.f32 %v45, 1e-06
    %v78 = vmax.f32 %v46, 1e-06
    %v79 = vmax.f32 %v47, 1e-06
    %v80 = vmax.f32 %v48, 1e-06
    %v81 = vmax.f32 %v49, 1e-06
    %v82 = vmax.f32 %v50, 1e-06
    %v83 = vmax.f32 %v51, 1e-06
    %v84 = vmax.f32 %v52, 1e-06
    %v85 = vmax.f32 %v53, 1e-06
    %v86 = vmax.f32 %v54, 1e-06
    %v87 = vmax.f32 %v55, 1e-06
    %v88 = vmax.f32 %v56, 1e-06
    %v89 = vmax.f32 %v57, 1e-06
    %v90 = vmax.f32 %v58, 1e-06
    %v91 = vmax.f32 %v59, 1e-06
    %p92 = scmp.eq.f32.partialorder %s27, 1.0
    // Predicated region
    $region14: #{tpu_custom_call.1} parent=1 // pred_check
      %p93 = pneg %p92
    $region15: #{tpu_custom_call.1} parent=1 // pred_check_branch
      %95 = sbr.rel (%p93) target = $region17
    $region16: #{tpu_custom_call.1} parent=1 // pred_region
      %96 = vmatprep.subr.mxu0 0.0
      %97 = vmatpush1.msra.mxu0 1.0
      %98 = vmatprep.subr.mxu0 0.0
      %99 = vmatpush1.msra.mxu0 1.0
      %100 = vmatprep.subr.mxu0 0.0
      %101 = vmatpush1.msra.mxu0 1.0
      %102 = vmatprep.subr.mxu0 0.0
      %103 = vmatpush1.msra.mxu0 1.0
      %104 = vmatprep.subr.mxu0 0.0
      %105 = vmatpush1.msra.mxu0 1.0
      %106 = vmatprep.subr.mxu0 0.0
      %107 = vmatpush1.msra.mxu0 1.0
      %108 = vmatprep.subr.mxu0 0.0
      %109 = vmatpush1.msra.mxu0 1.0
      %110 = vmatprep.subr.mxu0 0.0
      %111 = vmatpush1.msra.mxu0 1.0
      %112 = vmatprep.subr.mxu0 0.0
      %113 = vmatpush1.msra.mxu0 1.0
      %114 = vmatprep.subr.mxu0 0.0
      %115 = vmatpush1.msra.mxu0 1.0
      %116 = vmatprep.subr.mxu0 0.0
      %117 = vmatpush1.msra.mxu0 1.0
      %118 = vmatprep.subr.mxu0 0.0
      %119 = vmatpush1.msra.mxu0 1.0
      %120 = vmatprep.subr.mxu0 0.0
      %121 = vmatpush1.msra.mxu0 1.0
      %122 = vmatprep.subr.mxu0 0.0
      %123 = vmatpush1.msra.mxu0 1.0
      %124 = vmatprep.subr.mxu0 0.0
      %125 = vmatpush1.msra.mxu0 1.0
      %126 = vmatprep.subr.mxu0 0.0
      %127 = vmatpush1.msra.mxu0 1.0
      %128 = vmatprep.subr.mxu0 0.0
      %129 = vmatpush2.msra.mxu0 1.0
      %130 = vmatprep.subr.mxu0 0.0
      %131 = vmatpush2.msra.mxu0 1.0
      %132 = vmatprep.subr.mxu0 0.0
      %133 = vmatpush2.msra.mxu0 1.0
      %134 = vmatprep.subr.mxu0 0.0
      %135 = vmatpush2.msra.mxu0 1.0
      %136 = vmatprep.subr.mxu0 0.0
      %137 = vmatpush2.msra.mxu0 1.0
      %138 = vmatprep.subr.mxu0 0.0
      %139 = vmatpush2.msra.mxu0 1.0
      %140 = vmatprep.subr.mxu0 0.0
      %141 = vmatpush2.msra.mxu0 1.0
      %142 = vmatprep.subr.mxu0 0.0
      %143 = vmatpush2.msra.mxu0 1.0
      %144 = vmatprep.subr.mxu0 0.0
      %145 = vmatpush2.msra.mxu0 1.0
      %146 = vmatprep.subr.mxu0 0.0
      %147 = vmatpush2.msra.mxu0 1.0
      %148 = vmatprep.subr.mxu0 0.0
      %149 = vmatpush2.msra.mxu0 1.0
      %150 = vmatprep.subr.mxu0 0.0
      %151 = vmatpush2.msra.mxu0 1.0
      %152 = vmatprep.subr.mxu0 0.0
      %153 = vmatpush2.msra.mxu0 1.0
      %154 = vmatprep.subr.mxu0 0.0
      %155 = vmatpush2.msra.mxu0 1.0
      %156 = vmatprep.subr.mxu0 0.0
      %157 = vmatpush2.msra.mxu0 1.0
      %158 = vmatprep.subr.mxu0 0.0
      %159 = vmatpush2.msra.mxu0 1.0
      %160 = vmatprep.mubr.f32.mxu0 %v61
      %161 = vmatmul.mubr.f32.gmra.mxu0 %v60
      %v162 = vpop.f32.mrf.mxu0
      %v163 = vadd.f32 0.0, %v162
      %v164 = vpop.f32.mrf.mxu0
      %165 = vmatprep.mubr.f32.mxu0 %v63
      %166 = vmatmul.mubr.f32.gmra.mxu0 %v62
      %v167 = vpop.f32.mrf.mxu0
      %v168 = vadd.f32 0.0, %v167
      %v169 = vpop.f32.mrf.mxu0
      %170 = vmatprep.mubr.f32.mxu0 %v65
      %171 = vmatmul.mubr.f32.gmra.mxu0 %v64
      %v172 = vpop.f32.mrf.mxu0
      %v173 = vadd.f32 0.0, %v172
      %v174 = vpop.f32.mrf.mxu0
      %175 = vmatprep.mubr.f32.mxu0 %v67
      %176 = vmatmul.mubr.f32.gmra.mxu0 %v66
      %v177 = vpop.f32.mrf.mxu0
      %v178 = vadd.f32 0.0, %v177
      %v179 = vpop.f32.mrf.mxu0
      %180 = vmatprep.mubr.f32.mxu0 %v69
      %181 = vmatmul.mubr.f32.gmra.mxu0 %v68
      %v182 = vpop.f32.mrf.mxu0
      %v183 = vadd.f32 0.0, %v182
      %v184 = vpop.f32.mrf.mxu0
      %185 = vmatprep.mubr.f32.mxu0 %v71
      %186 = vmatmul.mubr.f32.gmra.mxu0 %v70
      %v187 = vpop.f32.mrf.mxu0
      %v188 = vadd.f32 0.0, %v187
      %v189 = vpop.f32.mrf.mxu0
      %190 = vmatprep.mubr.f32.mxu0 %v73
      %191 = vmatmul.mubr.f32.gmra.mxu0 %v72
      %v192 = vpop.f32.mrf.mxu0
      %v193 = vadd.f32 0.0, %v192
      %v194 = vpop.f32.mrf.mxu0
      %195 = vmatprep.mubr.f32.mxu0 %v75
      %196 = vmatmul.mubr.f32.gmra.mxu0 %v74
      %v197 = vpop.f32.mrf.mxu0
      %v198 = vadd.f32 0.0, %v197
      %v199 = vpop.f32.mrf.mxu0
      %200 = vmatprep.mubr.f32.mxu0 %v77
      %201 = vmatmul.mubr.f32.gmra.mxu0 %v76
      %v202 = vpop.f32.mrf.mxu0
      %v203 = vadd.f32 0.0, %v202
      %v204 = vpop.f32.mrf.mxu0
      %205 = vmatprep.mubr.f32.mxu0 %v79
      %206 = vmatmul.mubr.f32.gmra.mxu0 %v78
      %v207 = vpop.f32.mrf.mxu0
      %v208 = vadd.f32 0.0, %v207
      %v209 = vpop.f32.mrf.mxu0
      %210 = vmatprep.mubr.f32.mxu0 %v81
      %211 = vmatmul.mubr.f32.gmra.mxu0 %v80
      %v212 = vpop.f32.mrf.mxu0
      %v213 = vadd.f32 0.0, %v212
      %v214 = vpop.f32.mrf.mxu0
      %215 = vmatprep.mubr.f32.mxu0 %v83
      %216 = vmatmul.mubr.f32.gmra.mxu0 %v82
      %v217 = vpop.f32.mrf.mxu0
      %v218 = vadd.f32 0.0, %v217
      %v219 = vpop.f32.mrf.mxu0
      %220 = vmatprep.mubr.f32.mxu0 %v85
      %221 = vmatmul.mubr.f32.gmra.mxu0 %v84
      %v222 = vpop.f32.mrf.mxu0
      %v223 = vadd.f32 0.0, %v222
      %v224 = vpop.f32.mrf.mxu0
      %225 = vmatprep.mubr.f32.mxu0 %v87
      %226 = vmatmul.mubr.f32.gmra.mxu0 %v86
      %v227 = vpop.f32.mrf.mxu0
      %v228 = vadd.f32 0.0, %v227
      %v229 = vpop.f32.mrf.mxu0
      %230 = vmatprep.mubr.f32.mxu0 %v89
      %231 = vmatmul.mubr.f32.gmra.mxu0 %v88
      %v232 = vpop.f32.mrf.mxu0
      %v233 = vadd.f32 0.0, %v232
      %v234 = vpop.f32.mrf.mxu0
      %235 = vmatprep.mubr.f32.mxu0 %v91
      %236 = vmatmul.mubr.f32.gmra.mxu0 %v90
      %v237 = vpop.f32.mrf.mxu0
      %v238 = vadd.f32 0.0, %v237
      %v239 = vpop.f32.mrf.mxu0
      %240 = vdwg.mxu0
      %241 = vxpose.xlu0.b32.start [1/16] %v163, 128
      %242 = vxpose.xlu0.b32.cont [2/16] %v168, 128
      %243 = vxpose.xlu0.b32.cont [3/16] %v173, 128
      %244 = vxpose.xlu0.b32.cont [4/16] %v178, 128
      %245 = vxpose.xlu0.b32.cont [5/16] %v183, 128
      %246 = vxpose.xlu0.b32.cont [6/16] %v188, 128
      %247 = vxpose.xlu0.b32.cont [7/16] %v193, 128
      %248 = vxpose.xlu0.b32.cont [8/16] %v198, 128
      %249 = vxpose.xlu0.b32.cont [9/16] %v203, 128
      %250 = vxpose.xlu0.b32.cont [10/16] %v208, 128
      %251 = vxpose.xlu0.b32.cont [11/16] %v213, 128
      %252 = vxpose.xlu0.b32.cont [12/16] %v218, 128
      %253 = vxpose.xlu0.b32.cont [13/16] %v223, 128
      %254 = vxpose.xlu0.b32.cont [14/16] %v228, 128
      %255 = vxpose.xlu0.b32.cont [15/16] %v233, 128
      %256 = vxpose.xlu0.b32.end [16/16] %v238, 128
      %v257 = vpop.trf.xlu0
      %v258 = vpop.trf.xlu0
      %v259 = vpop.trf.xlu0
      %v260 = vpop.trf.xlu0
      %v261 = vpop.trf.xlu0
      %v262 = vpop.trf.xlu0
      %v263 = vpop.trf.xlu0
      %v264 = vpop.trf.xlu0
      %v265 = vpop.trf.xlu0
      %v266 = vpop.trf.xlu0
      %v267 = vpop.trf.xlu0
      %v268 = vpop.trf.xlu0
      %v269 = vpop.trf.xlu0
      %v270 = vpop.trf.xlu0
      %v271 = vpop.trf.xlu0
      %v272 = vpop.trf.xlu0
      %v273 = vmul.f32 %v257, 0.00390625
      %274 = vst [vmem:[#allocation6] sm:$0x1] %v273
    $region17: #{tpu_custom_call.1} parent=1 // pred_fallthru
      _
    %p275 = scmp.ne.f32.partialorder %s27, 1.0
    // Predicated region
    $region18: #{tpu_custom_call.1} parent=1 // pred_check
      %p276 = pneg %p275
    $region19: #{tpu_custom_call.1} parent=1 // pred_check_branch
      %278 = sbr.rel (%p276) target = $region21
    $region20: #{tpu_custom_call.1} parent=1 // pred_region
      %v279 = vlog2.pop %v60
      %v280 = vmul.f32 %v279, 0.6931472
      %v281 = vlog2.pop %v61
      %v282 = vmul.f32 %v281, 0.6931472
      %v283 = vlog2.pop %v62
      %v284 = vmul.f32 %v283, 0.6931472
      %v285 = vlog2.pop %v63
      %v286 = vmul.f32 %v285, 0.6931472
      %v287 = vlog2.pop %v64
      %v288 = vmul.f32 %v287, 0.6931472
      %v289 = vlog2.pop %v65
      %v290 = vmul.f32 %v289, 0.6931472
      %v291 = vlog2.pop %v66
      %v292 = vmul.f32 %v291, 0.6931472
      %v293 = vlog2.pop %v67
      %v294 = vmul.f32 %v293, 0.6931472
      %v295 = vlog2.pop %v68
      %v296 = vmul.f32 %v295, 0.6931472
      %v297 = vlog2.pop %v69
      %v298 = vmul.f32 %v297, 0.6931472
      %v299 = vlog2.pop %v70
      %v300 = vmul.f32 %v299, 0.6931472
      %v301 = vlog2.pop %v71
      %v302 = vmul.f32 %v301, 0.6931472
      %v303 = vlog2.pop %v72
      %v304 = vmul.f32 %v303, 0.6931472
      %v305 = vlog2.pop %v73
      %v306 = vmul.f32 %v305, 0.6931472
      %v307 = vlog2.pop %v74
      %v308 = vmul.f32 %v307, 0.6931472
      %v309 = vlog2.pop %v75
      %v310 = vmul.f32 %v309, 0.6931472
      %v311 = vlog2.pop %v76
      %v312 = vmul.f32 %v311, 0.6931472
      %v313 = vlog2.pop %v77
      %v314 = vmul.f32 %v313, 0.6931472
      %v315 = vlog2.pop %v78
      %v316 = vmul.f32 %v315, 0.6931472
      %v317 = vlog2.pop %v79
      %v318 = vmul.f32 %v317, 0.6931472
      %v319 = vlog2.pop %v80
      %v320 = vmul.f32 %v319, 0.6931472
      %v321 = vlog2.pop %v81
      %v322 = vmul.f32 %v321, 0.6931472
      %v323 = vlog2.pop %v82
      %v324 = vmul.f32 %v323, 0.6931472
      %v325 = vlog2.pop %v83
      %v326 = vmul.f32 %v325, 0.6931472
      %v327 = vlog2.pop %v84
      %v328 = vmul.f32 %v327, 0.6931472
      %v329 = vlog2.pop %v85
      %v330 = vmul.f32 %v329, 0.6931472
      %v331 = vlog2.pop %v86
      %v332 = vmul.f32 %v331, 0.6931472
      %v333 = vlog2.pop %v87
      %v334 = vmul.f32 %v333, 0.6931472
      %v335 = vlog2.pop %v88
      %v336 = vmul.f32 %v335, 0.6931472
      %v337 = vlog2.pop %v89
      %v338 = vmul.f32 %v337, 0.6931472
      %v339 = vlog2.pop %v90
      %v340 = vmul.f32 %v339, 0.6931472
      %v341 = vlog2.pop %v91
      %v342 = vmul.f32 %v341, 0.6931472
      %v343 = vstv %s27
      %v344 = vmul.f32 %v343, %v280
      %v345 = vmul.f32 %v343, %v282
      %v346 = vmul.f32 %v343, %v284
      %v347 = vmul.f32 %v343, %v286
      %v348 = vmul.f32 %v343, %v288
      %v349 = vmul.f32 %v343, %v290
      %v350 = vmul.f32 %v343, %v292
      %v351 = vmul.f32 %v343, %v294
      %v352 = vmul.f32 %v343, %v296
      %v353 = vmul.f32 %v343, %v298
      %v354 = vmul.f32 %v343, %v300
      %v355 = vmul.f32 %v343, %v302
      %v356 = vmul.f32 %v343, %v304
      %v357 = vmul.f32 %v343, %v306
      %v358 = vmul.f32 %v343, %v308
      %v359 = vmul.f32 %v343, %v310
      %v360 = vmul.f32 %v343, %v312
      %v361 = vmul.f32 %v343, %v314
      %v362 = vmul.f32 %v343, %v316
      %v363 = vmul.f32 %v343, %v318
      %v364 = vmul.f32 %v343, %v320
      %v365 = vmul.f32 %v343, %v322
      %v366 = vmul.f32 %v343, %v324
      %v367 = vmul.f32 %v343, %v326
      %v368 = vmul.f32 %v343, %v328
      %v369 = vmul.f32 %v343, %v330
      %v370 = vmul.f32 %v343, %v332
      %v371 = vmul.f32 %v343, %v334
      %v372 = vmul.f32 %v343, %v336
      %v373 = vmul.f32 %v343, %v338
      %v374 = vmul.f32 %v343, %v340
      %v375 = vmul.f32 %v343, %v342
      %v376 = vmul.f32 %v344, 1.442695
      %v377 = vpow.pop %v376
      %v378 = vmul.f32 %v345, 1.442695
      %v379 = vpow.pop %v378
      %v380 = vmul.f32 %v346, 1.442695
      %v381 = vpow.pop %v380
      %v382 = vmul.f32 %v347, 1.442695
      %v383 = vpow.pop %v382
      %v384 = vmul.f32 %v348, 1.442695
      %v385 = vpow.pop %v384
      %v386 = vmul.f32 %v349, 1.442695
      %v387 = vpow.pop %v386
      %v388 = vmul.f32 %v350, 1.442695
      %v389 = vpow.pop %v388
      %v390 = vmul.f32 %v351, 1.442695
      %v391 = vpow.pop %v390
      %v392 = vmul.f32 %v352, 1.442695
      %v393 = vpow.pop %v392
      %v394 = vmul.f32 %v353, 1.442695
      %v395 = vpow.pop %v394
      %v396 = vmul.f32 %v354, 1.442695
      %v397 = vpow.pop %v396
      %v398 = vmul.f32 %v355, 1.442695
      %v399 = vpow.pop %v398
      %v400 = vmul.f32 %v356, 1.442695
      %v401 = vpow.pop %v400
      %v402 = vmul.f32 %v357, 1.442695
      %v403 = vpow.pop %v402
      %v404 = vmul.f32 %v358, 1.442695
      %v405 = vpow.pop %v404
      %v406 = vmul.f32 %v359, 1.442695
      %v407 = vpow.pop %v406
      %v408 = vmul.f32 %v360, 1.442695
      %v409 = vpow.pop %v408
      %v410 = vmul.f32 %v361, 1.442695
      %v411 = vpow.pop %v410
      %v412 = vmul.f32 %v362, 1.442695
      %v413 = vpow.pop %v412
      %v414 = vmul.f32 %v363, 1.442695
      %v415 = vpow.pop %v414
      %v416 = vmul.f32 %v364, 1.442695
      %v417 = vpow.pop %v416
      %v418 = vmul.f32 %v365, 1.442695
      %v419 = vpow.pop %v418
      %v420 = vmul.f32 %v366, 1.442695
      %v421 = vpow.pop %v420
      %v422 = vmul.f32 %v367, 1.442695
      %v423 = vpow.pop %v422
      %v424 = vmul.f32 %v368, 1.442695
      %v425 = vpow.pop %v424
      %v426 = vmul.f32 %v369, 1.442695
      %v427 = vpow.pop %v426
      %v428 = vmul.f32 %v370, 1.442695
      %v429 = vpow.pop %v428
      %v430 = vmul.f32 %v371, 1.442695
      %v431 = vpow.pop %v430
      %v432 = vmul.f32 %v372, 1.442695
      %v433 = vpow.pop %v432
      %v434 = vmul.f32 %v373, 1.442695
      %v435 = vpow.pop %v434
      %v436 = vmul.f32 %v374, 1.442695
      %v437 = vpow.pop %v436
      %v438 = vmul.f32 %v375, 1.442695
      %v439 = vpow.pop %v438
      %440 = vmatprep.subr.mxu0 0.0
      %441 = vmatpush1.msra.mxu0 1.0
      %442 = vmatprep.subr.mxu0 0.0
      %443 = vmatpush1.msra.mxu0 1.0
      %444 = vmatprep.subr.mxu0 0.0
      %445 = vmatpush1.msra.mxu0 1.0
      %446 = vmatprep.subr.mxu0 0.0
      %447 = vmatpush1.msra.mxu0 1.0
      %448 = vmatprep.subr.mxu0 0.0
      %449 = vmatpush1.msra.mxu0 1.0
      %450 = vmatprep.subr.mxu0 0.0
      %451 = vmatpush1.msra.mxu0 1.0
      %452 = vmatprep.subr.mxu0 0.0
      %453 = vmatpush1.msra.mxu0 1.0
      %454 = vmatprep.subr.mxu0 0.0
      %455 = vmatpush1.msra.mxu0 1.0
      %456 = vmatprep.subr.mxu0 0.0
      %457 = vmatpush1.msra.mxu0 1.0
      %458 = vmatprep.subr.mxu0 0.0
      %459 = vmatpush1.msra.mxu0 1.0
      %460 = vmatprep.subr.mxu0 0.0
      %461 = vmatpush1.msra.mxu0 1.0
      %462 = vmatprep.subr.mxu0 0.0
      %463 = vmatpush1.msra.mxu0 1.0
      %464 = vmatprep.subr.mxu0 0.0
      %465 = vmatpush1.msra.mxu0 1.0
      %466 = vmatprep.subr.mxu0 0.0
      %467 = vmatpush1.msra.mxu0 1.0
      %468 = vmatprep.subr.mxu0 0.0
      %469 = vmatpush1.msra.mxu0 1.0
      %470 = vmatprep.subr.mxu0 0.0
      %471 = vmatpush1.msra.mxu0 1.0
      %472 = vmatprep.subr.mxu0 0.0
      %473 = vmatpush2.msra.mxu0 1.0
      %474 = vmatprep.subr.mxu0 0.0
      %475 = vmatpush2.msra.mxu0 1.0
      %476 = vmatprep.subr.mxu0 0.0
      %477 = vmatpush2.msra.mxu0 1.0
      %478 = vmatprep.subr.mxu0 0.0
      %479 = vmatpush2.msra.mxu0 1.0
      %480 = vmatprep.subr.mxu0 0.0
      %481 = vmatpush2.msra.mxu0 1.0
      %482 = vmatprep.subr.mxu0 0.0
      %483 = vmatpush2.msra.mxu0 1.0
      %484 = vmatprep.subr.mxu0 0.0
      %485 = vmatpush2.msra.mxu0 1.0
      %486 = vmatprep.subr.mxu0 0.0
      %487 = vmatpush2.msra.mxu0 1.0
      %488 = vmatprep.subr.mxu0 0.0
      %489 = vmatpush2.msra.mxu0 1.0
      %490 = vmatprep.subr.mxu0 0.0
      %491 = vmatpush2.msra.mxu0 1.0
      %492 = vmatprep.subr.mxu0 0.0
      %493 = vmatpush2.msra.mxu0 1.0
      %494 = vmatprep.subr.mxu0 0.0
      %495 = vmatpush2.msra.mxu0 1.0
      %496 = vmatprep.subr.mxu0 0.0
      %497 = vmatpush2.msra.mxu0 1.0
      %498 = vmatprep.subr.mxu0 0.0
      %499 = vmatpush2.msra.mxu0 1.0
      %500 = vmatprep.subr.mxu0 0.0
      %501 = vmatpush2.msra.mxu0 1.0
      %502 = vmatprep.subr.mxu0 0.0
      %503 = vmatpush2.msra.mxu0 1.0
      %504 = vmatprep.mubr.f32.mxu0 %v379
      %505 = vmatmul.mubr.f32.gmra.mxu0 %v377
      %v506 = vpop.f32.mrf.mxu0
      %v507 = vadd.f32 0.0, %v506
      %v508 = vpop.f32.mrf.mxu0
      %509 = vmatprep.mubr.f32.mxu0 %v383
      %510 = vmatmul.mubr.f32.gmra.mxu0 %v381
      %v511 = vpop.f32.mrf.mxu0
      %v512 = vadd.f32 0.0, %v511
      %v513 = vpop.f32.mrf.mxu0
      %514 = vmatprep.mubr.f32.mxu0 %v387
      %515 = vmatmul.mubr.f32.gmra.mxu0 %v385
      %v516 = vpop.f32.mrf.mxu0
      %v517 = vadd.f32 0.0, %v516
      %v518 = vpop.f32.mrf.mxu0
      %519 = vmatprep.mubr.f32.mxu0 %v391
      %520 = vmatmul.mubr.f32.gmra.mxu0 %v389
      %v521 = vpop.f32.mrf.mxu0
      %v522 = vadd.f32 0.0, %v521
      %v523 = vpop.f32.mrf.mxu0
      %524 = vmatprep.mubr.f32.mxu0 %v395
      %525 = vmatmul.mubr.f32.gmra.mxu0 %v393
      %v526 = vpop.f32.mrf.mxu0
      %v527 = vadd.f32 0.0, %v526
      %v528 = vpop.f32.mrf.mxu0
      %529 = vmatprep.mubr.f32.mxu0 %v399
      %530 = vmatmul.mubr.f32.gmra.mxu0 %v397
      %v531 = vpop.f32.mrf.mxu0
      %v532 = vadd.f32 0.0, %v531
      %v533 = vpop.f32.mrf.mxu0
      %534 = vmatprep.mubr.f32.mxu0 %v403
      %535 = vmatmul.mubr.f32.gmra.mxu0 %v401
      %v536 = vpop.f32.mrf.mxu0
      %v537 = vadd.f32 0.0, %v536
      %v538 = vpop.f32.mrf.mxu0
      %539 = vmatprep.mubr.f32.mxu0 %v407
      %540 = vmatmul.mubr.f32.gmra.mxu0 %v405
      %v541 = vpop.f32.mrf.mxu0
      %v542 = vadd.f32 0.0, %v541
      %v543 = vpop.f32.mrf.mxu0
      %544 = vmatprep.mubr.f32.mxu0 %v411
      %545 = vmatmul.mubr.f32.gmra.mxu0 %v409
      %v546 = vpop.f32.mrf.mxu0
      %v547 = vadd.f32 0.0, %v546
      %v548 = vpop.f32.mrf.mxu0
      %549 = vmatprep.mubr.f32.mxu0 %v415
      %550 = vmatmul.mubr.f32.gmra.mxu0 %v413
      %v551 = vpop.f32.mrf.mxu0
      %v552 = vadd.f32 0.0, %v551
      %v553 = vpop.f32.mrf.mxu0
      %554 = vmatprep.mubr.f32.mxu0 %v419
      %555 = vmatmul.mubr.f32.gmra.mxu0 %v417
      %v556 = vpop.f32.mrf.mxu0
      %v557 = vadd.f32 0.0, %v556
      %v558 = vpop.f32.mrf.mxu0
      %559 = vmatprep.mubr.f32.mxu0 %v423
      %560 = vmatmul.mubr.f32.gmra.mxu0 %v421
      %v561 = vpop.f32.mrf.mxu0
      %v562 = vadd.f32 0.0, %v561
      %v563 = vpop.f32.mrf.mxu0
      %564 = vmatprep.mubr.f32.mxu0 %v427
      %565 = vmatmul.mubr.f32.gmra.mxu0 %v425
      %v566 = vpop.f32.mrf.mxu0
      %v567 = vadd.f32 0.0, %v566
      %v568 = vpop.f32.mrf.mxu0
      %569 = vmatprep.mubr.f32.mxu0 %v431
      %570 = vmatmul.mubr.f32.gmra.mxu0 %v429
      %v571 = vpop.f32.mrf.mxu0
      %v572 = vadd.f32 0.0, %v571
      %v573 = vpop.f32.mrf.mxu0
      %574 = vmatprep.mubr.f32.mxu0 %v435
      %575 = vmatmul.mubr.f32.gmra.mxu0 %v433
      %v576 = vpop.f32.mrf.mxu0
      %v577 = vadd.f32 0.0, %v576
      %v578 = vpop.f32.mrf.mxu0
      %579 = vmatprep.mubr.f32.mxu0 %v439
      %580 = vmatmul.mubr.f32.gmra.mxu0 %v437
      %v581 = vpop.f32.mrf.mxu0
      %v582 = vadd.f32 0.0, %v581
      %v583 = vpop.f32.mrf.mxu0
      %584 = vdwg.mxu0
      %585 = vxpose.xlu0.b32.start [1/16] %v507, 128
      %586 = vxpose.xlu0.b32.cont [2/16] %v512, 128
      %587 = vxpose.xlu0.b32.cont [3/16] %v517, 128
      %588 = vxpose.xlu0.b32.cont [4/16] %v522, 128
      %589 = vxpose.xlu0.b32.cont [5/16] %v527, 128
      %590 = vxpose.xlu0.b32.cont [6/16] %v532, 128
      %591 = vxpose.xlu0.b32.cont [7/16] %v537, 128
      %592 = vxpose.xlu0.b32.cont [8/16] %v542, 128
      %593 = vxpose.xlu0.b32.cont [9/16] %v547, 128
      %594 = vxpose.xlu0.b32.cont [10/16] %v552, 128
      %595 = vxpose.xlu0.b32.cont [11/16] %v557, 128
      %596 = vxpose.xlu0.b32.cont [12/16] %v562, 128
      %597 = vxpose.xlu0.b32.cont [13/16] %v567, 128
      %598 = vxpose.xlu0.b32.cont [14/16] %v572, 128
      %599 = vxpose.xlu0.b32.cont [15/16] %v577, 128
      %600 = vxpose.xlu0.b32.end [16/16] %v582, 128
      %v601 = vpop.trf.xlu0
      %v602 = vpop.trf.xlu0
      %v603 = vpop.trf.xlu0
      %v604 = vpop.trf.xlu0
      %v605 = vpop.trf.xlu0
      %v606 = vpop.trf.xlu0
      %v607 = vpop.trf.xlu0
      %v608 = vpop.trf.xlu0
      %v609 = vpop.trf.xlu0
      %v610 = vpop.trf.xlu0
      %v611 = vpop.trf.xlu0
      %v612 = vpop.trf.xlu0
      %v613 = vpop.trf.xlu0
      %v614 = vpop.trf.xlu0
      %v615 = vpop.trf.xlu0
      %v616 = vpop.trf.xlu0
      %v617 = vstv %s27
      %v618 = vrcp.pop %v617
      %s619 = vtos %v618
      %v620 = vlog2.pop %v601
      %v621 = vmul.f32 %v620, 0.6931472
      %v622 = vsub.f32 %v621, 5.5451775
      %v623 = vstv %s619
      %v624 = vmul.f32 %v622, %v623
      %v625 = vmul.f32 %v624, 1.442695
      %v626 = vpow.pop %v625
      %627 = vst [vmem:[#allocation6] sm:$0x1] %v626
    $region21: #{tpu_custom_call.1} parent=1 // pred_fallthru
      _
    // Predicated region
    $region22: #{tpu_custom_call.1} parent=1 // pred_check
      _
    $region23: #{tpu_custom_call.1} parent=1 // pred_check_branch
      %629 = sbr.rel (0) target = $region25
    $region24: #{tpu_custom_call.1} parent=1 // pred_region
      %s631 = ssub.s32 16, 16
      %632 = vsyncadd [#allocation5], %s631
      %s634 = sshll.u32 [#allocation6], 4
      %s635 = int_to_ptr.vmem [resolvable:$true] %s634
      %637 = dma.vmem_to_hbm [thread:$0]  %s635, 16, %s2, [#allocation5]
    $region25: #{tpu_custom_call.1} parent=1 // pred_fallthru
      _
    // Predicated region
    $region26: #{tpu_custom_call.1} parent=1 // pred_check
      _
    $region27: #{tpu_custom_call.1} parent=1 // pred_check_branch
      %639 = sbr.rel (0) target = $region29
    $region28: #{tpu_custom_call.1} parent=1 // pred_region
      %640 = dma.done [#allocation5], 16
    $region29: #{tpu_custom_call.1} parent=1 // pred_fallthru
      _
    %641 = vsyncpa [#allocation4], 1
    %642 = vsyncpa [#allocation5], 1

</llo_original>
